<compile_context>
chip_gen: v7x
topology: tpu7x:2x2x1
jax: 0.10.0
libtpu: 0.0.40
codegen_flags: <defaults>
</compile_context>

<pallas_src>
import functools

import jax
import jax.numpy as jnp
from jax.experimental import pallas as pl
from jax.experimental.pallas import tpu as pltpu


def _residual_mha_kernel(x_ref, wqkv_ref, bqkv_ref, wfc_ref, bfc_ref, o_ref, *,
                         b_tile, seq, num_heads, head_dim, embed, scaling):
    rows = b_tile * seq
    d = embed

    x_f32 = x_ref[...]                                   # (rows, d) f32 (residual)
    x_bf = x_f32.astype(jnp.bfloat16)

    # ---- fused QKV projection over the whole batch tile (one big MXU matmul) ----
    qkv = jnp.dot(x_bf, wqkv_ref[...],
                  preferred_element_type=jnp.float32) + bqkv_ref[...]   # (rows, 3d)

    # [Q | K | V], each head-blocked along the last dim; expose the batch dim so the
    # attention matmuls are batched over the whole tile.
    q = qkv[:, 0 * d:1 * d].reshape(b_tile, seq, d)
    k = qkv[:, 1 * d:2 * d].reshape(b_tile, seq, d)
    v = qkv[:, 2 * d:3 * d].reshape(b_tile, seq, d)

    head_outs = []
    for h in range(num_heads):                            # short static unroll
        lo = h * head_dim
        qh = q[:, :, lo:lo + head_dim].astype(jnp.bfloat16)   # (b_tile, n, hd)
        kh = k[:, :, lo:lo + head_dim].astype(jnp.bfloat16)
        vh = v[:, :, lo:lo + head_dim].astype(jnp.bfloat16)

        s = jnp.einsum('bqd,bkd->bqk', qh, kh,
                       preferred_element_type=jnp.float32)     # (b_tile, n, n) f32
        s = s - jnp.max(s, axis=-1, keepdims=True)
        p = jnp.exp(s)
        # softmax denominator and post-softmax /sqrt(embed) fused into one EUP vrcp
        attn = p * pl.reciprocal(jnp.sum(p, axis=-1, keepdims=True) * scaling,
                                 approx=True)
        head_outs.append(
            jnp.einsum('bqk,bkd->bqd', attn.astype(jnp.bfloat16), vh,
                       preferred_element_type=jnp.float32))    # (b_tile, n, hd) f32

    ctx = jnp.concatenate(head_outs, axis=-1).reshape(rows, d)  # (rows, d) f32

    # ---- fused output projection (one big MXU matmul) + bias + residual add ----
    out = (jnp.dot(ctx.astype(jnp.bfloat16), wfc_ref[...],
                   preferred_element_type=jnp.float32)
           + bfc_ref[...] + x_f32)
    o_ref[...] = out.astype(o_ref.dtype)


def _pick_b_tile(bsz, seq):
    """Batch elements per grid step: aim for a few hundred rows per tile."""
    target = max(1, 512 // max(seq, 1))
    if bsz <= target:
        return bsz
    for bt in range(min(target, bsz), 0, -1):
        if bsz % bt == 0 and (bt * seq) % 8 == 0:
            return bt
    return 1


def residual_mha(x, w_qkv, b_qkv, w_fc, b_fc, *, num_heads):
    """ResidualAdd(MultiHeadAttention) forward:  MHA(x) + x.

    x: (b, n, d) f32.  w_qkv: (d, 3d), b_qkv: (3d,), w_fc: (d, d), b_fc: (d,)
    with the y = x @ W + b convention (W = torch Linear weight.T).
    """
    bsz, n, d = x.shape
    assert d % num_heads == 0
    head_dim = d // num_heads
    scaling = float(d) ** 0.5

    # Permute qkv columns so the kernel sees [Q | K | V], head-blocked, matching the
    # torch column index  h*(head_dim*3) + dh*3 + qkv_idx  bit-for-bit.
    cols = jnp.arange(3 * d)
    qkv_idx = cols // d
    rem = cols % d
    h_idx = rem // head_dim
    dh_idx = rem % head_dim
    perm = h_idx * (head_dim * 3) + dh_idx * 3 + qkv_idx

    w_qkv_p = w_qkv[:, perm].astype(jnp.bfloat16)          # bf16 MXU operands
    b_qkv_p = b_qkv[perm].reshape(1, 3 * d).astype(jnp.float32)
    w_fc_b = w_fc.astype(jnp.bfloat16)
    b_fc_2d = b_fc.reshape(1, d).astype(jnp.float32)

    b_tile = _pick_b_tile(bsz, n)
    assert bsz % b_tile == 0 and (b_tile == bsz or (b_tile * n) % 8 == 0)
    grid = (bsz // b_tile,)
    rows_t = b_tile * n

    # Flatten (b, n) -> rows so the projections run over one big row slab.
    x2 = x.reshape(bsz * n, d)

    kernel = functools.partial(_residual_mha_kernel, b_tile=b_tile, seq=n,
                               num_heads=num_heads, head_dim=head_dim,
                               embed=d, scaling=scaling)

    out2 = pl.pallas_call(
        kernel,
        out_shape=jax.ShapeDtypeStruct((bsz * n, d), x.dtype),
        grid_spec=pltpu.PrefetchScalarGridSpec(
            num_scalar_prefetch=0,
            grid=grid,
            in_specs=[
                pl.BlockSpec((rows_t, d), lambda i: (i, 0)),      # x rows (f32)
                pl.BlockSpec((d, 3 * d), lambda i: (0, 0)),       # w_qkv (bf16, perm)
                pl.BlockSpec((1, 3 * d), lambda i: (0, 0)),       # b_qkv (perm)
                pl.BlockSpec((d, d), lambda i: (0, 0)),           # w_fc (bf16)
                pl.BlockSpec((1, d), lambda i: (0, 0)),           # b_fc
            ],
            out_specs=pl.BlockSpec((rows_t, d), lambda i: (i, 0)),
        ),
        compiler_params=pltpu.CompilerParams(
            dimension_semantics=("parallel",),           # megacore: shard batch tiles
            vmem_limit_bytes=32 * 1024 * 1024),
    )(x2, w_qkv_p, b_qkv_p, w_fc_b, b_fc_2d)

    return out2.reshape(bsz, n, d)


def _reference(x, w_qkv, b_qkv, w_fc, b_fc, *, num_heads):
    """Pure-JAX (f32) re-implementation of ResidualAdd(MHA) for validation."""
    bsz, n, d = x.shape
    hd = d // num_heads
    qkv = x @ w_qkv + b_qkv                                     # (b, n, 3d)
    qkv = qkv.reshape(bsz, n, num_heads, hd, 3)                 # 'b n (h d qkv)'
    qkv = jnp.transpose(qkv, (4, 0, 2, 1, 3))                   # (3, b, h, n, hd)
    q, k, v = qkv[0], qkv[1], qkv[2]
    s = jnp.einsum('bhqd,bhkd->bhqk', q, k)
    attn = jax.nn.softmax(s, axis=-1) / (d ** 0.5)
    out = jnp.einsum('bhal,bhlv->bhav', attn, v)                # (b, h, n, hd)
    out = jnp.transpose(out, (0, 2, 1, 3)).reshape(bsz, n, d)
    mha = out @ w_fc + b_fc
    return mha + x                                              # ResidualAdd


if __name__ == "__main__":
    # Small shapes consistent with the module: batch=2, seq=8, embed=32, heads=4.
    batch, seq, embed, num_heads = 2, 8, 32, 4

    key = jax.random.PRNGKey(0)
    kx, k1, k2, k3, k4 = jax.random.split(key, 5)
    x = jax.random.normal(kx, (batch, seq, embed), dtype=jnp.float32)
    w_qkv = jax.random.normal(k1, (embed, 3 * embed), dtype=jnp.float32) * 0.05
    b_qkv = jax.random.normal(k2, (3 * embed,), dtype=jnp.float32) * 0.05
    w_fc = jax.random.normal(k3, (embed, embed), dtype=jnp.float32) * 0.05
    b_fc = jax.random.normal(k4, (embed,), dtype=jnp.float32) * 0.05

    out = residual_mha(x, w_qkv, b_qkv, w_fc, b_fc, num_heads=num_heads)
    out = jax.block_until_ready(out)

    ref = _reference(x, w_qkv, b_qkv, w_fc, b_fc, num_heads=num_heads)
    assert out.shape == (batch, seq, embed)
    # bf16 matmul operands + approx reciprocal => slightly looser tolerance than f32.
    assert jnp.allclose(out, ref, atol=2e-2, rtol=2e-2), "mismatch vs reference"

    print("KERNEL_OK")
</pallas_src>

<mosaic_0001>
module attributes {stable_mosaic.version = 11 : i64} {
  func.func @_residual_mha_kernel(%arg0: i32, %arg1: memref<16x32xf32, #tpu.memory_space<vmem>>, %arg2: memref<32x96xbf16, #tpu.memory_space<vmem>>, %arg3: memref<1x96xf32, #tpu.memory_space<vmem>>, %arg4: memref<32x32xbf16, #tpu.memory_space<vmem>>, %arg5: memref<1x32xf32, #tpu.memory_space<vmem>>, %arg6: memref<16x32xf32, #tpu.memory_space<vmem>>) attributes {dimension_semantics = [#tpu.dimension_semantics<parallel>], iteration_bounds = array<i64: 1>, scalar_prefetch = 0 : i64, scratch_operands = 0 : i64, tpu.core_type = #tpu.core_type<tc>, window_params = [{transform_indices = @transform_0, window_bounds = array<i64: 16, 32>}, {pipeline_mode = #tpu.pipeline_mode<synchronous>, transform_indices = @transform_1, window_bounds = array<i64: 32, 96>}, {pipeline_mode = #tpu.pipeline_mode<synchronous>, transform_indices = @transform_2, window_bounds = array<i64: 1, 96>}, {pipeline_mode = #tpu.pipeline_mode<synchronous>, transform_indices = @transform_3, window_bounds = array<i64: 32, 32>}, {pipeline_mode = #tpu.pipeline_mode<synchronous>, transform_indices = @transform_4, window_bounds = array<i64: 1, 32>}, {transform_indices = @transform_5, window_bounds = array<i64: 16, 32>}]} {
    %c0 = arith.constant 0 : index
    %c0_0 = arith.constant 0 : index
    %0 = vector.load %arg1[%c0, %c0_0] : memref<16x32xf32, #tpu.memory_space<vmem>>, vector<16x32xf32>
    %1 = arith.truncf %0 : vector<16x32xf32> to vector<16x32xbf16>
    %c0_1 = arith.constant 0 : index
    %c0_2 = arith.constant 0 : index
    %2 = vector.load %arg2[%c0_1, %c0_2] : memref<32x96xbf16, #tpu.memory_space<vmem>>, vector<32x96xbf16>
    %cst = arith.constant dense<0.000000e+00> : vector<16x96xf32>
    %3 = tpu.matmul %1, %2, %cst {dimension_numbers = #tpu.dot_dimension_numbers<[1], [0], [0], [1], [0, 0, 1, 1], [], []>} : vector<16x32xbf16>, vector<32x96xbf16>, vector<16x96xf32> -> vector<16x96xf32>
    %c0_3 = arith.constant 0 : index
    %c0_4 = arith.constant 0 : index
    %4 = vector.load %arg3[%c0_3, %c0_4] : memref<1x96xf32, #tpu.memory_space<vmem>>, vector<1x96xf32>
    %5 = vector.broadcast %4 : vector<1x96xf32> to vector<16x96xf32>
    %6 = arith.addf %3, %5 : vector<16x96xf32>
    %7 = vector.extract_strided_slice %6 {offsets = [0, 0], sizes = [16, 32], strides = [1, 1]} : vector<16x96xf32> to vector<16x32xf32>
    %8 = vector.shape_cast %7 : vector<16x32xf32> to vector<2x8x32xf32>
    %9 = vector.extract_strided_slice %6 {offsets = [0, 32], sizes = [16, 32], strides = [1, 1]} : vector<16x96xf32> to vector<16x32xf32>
    %10 = vector.shape_cast %9 : vector<16x32xf32> to vector<2x8x32xf32>
    %11 = vector.extract_strided_slice %6 {offsets = [0, 64], sizes = [16, 32], strides = [1, 1]} : vector<16x96xf32> to vector<16x32xf32>
    %12 = vector.shape_cast %11 : vector<16x32xf32> to vector<2x8x32xf32>
    %13 = vector.extract_strided_slice %8 {offsets = [0, 0, 0], sizes = [2, 8, 8], strides = [1, 1, 1]} : vector<2x8x32xf32> to vector<2x8x8xf32>
    %14 = arith.truncf %13 : vector<2x8x8xf32> to vector<2x8x8xbf16>
    %15 = vector.extract_strided_slice %10 {offsets = [0, 0, 0], sizes = [2, 8, 8], strides = [1, 1, 1]} : vector<2x8x32xf32> to vector<2x8x8xf32>
    %16 = arith.truncf %15 : vector<2x8x8xf32> to vector<2x8x8xbf16>
    %17 = vector.extract_strided_slice %12 {offsets = [0, 0, 0], sizes = [2, 8, 8], strides = [1, 1, 1]} : vector<2x8x32xf32> to vector<2x8x8xf32>
    %18 = arith.truncf %17 : vector<2x8x8xf32> to vector<2x8x8xbf16>
    "tpu.trace_start"() <{level = 10 : i32, message = "bqd,bkd->bqk"}> : () -> ()
    %cst_5 = arith.constant dense<0.000000e+00> : vector<2x8x8xf32>
    %19 = tpu.matmul %14, %16, %cst_5 {dimension_numbers = #tpu.dot_dimension_numbers<[2], [2], [1], [1], [0, 0, 0, 1, 1, 1], [0], [0]>} : vector<2x8x8xbf16>, vector<2x8x8xbf16>, vector<2x8x8xf32> -> vector<2x8x8xf32>
    "tpu.trace_stop"() : () -> ()
    %cst_6 = arith.constant dense<0xFF800000> : vector<2x8xf32>
    %20 = vector.multi_reduction <maximumf>, %19, %cst_6 [2] : vector<2x8x8xf32> to vector<2x8xf32>
    %21 = vector.shape_cast %20 : vector<2x8xf32> to vector<2x8x1xf32>
    %22 = vector.broadcast %21 : vector<2x8x1xf32> to vector<2x8x8xf32>
    %23 = arith.subf %19, %22 : vector<2x8x8xf32>
    %24 = math.exp %23 : vector<2x8x8xf32>
    %cst_7 = arith.constant dense<0.000000e+00> : vector<2x8xf32>
    %25 = vector.multi_reduction <add>, %24, %cst_7 [2] : vector<2x8x8xf32> to vector<2x8xf32>
    %26 = vector.shape_cast %25 : vector<2x8xf32> to vector<2x8x1xf32>
    %cst_8 = arith.constant 5.65685415 : f32
    %27 = vector.broadcast %cst_8 : f32 to vector<2x8x1xf32>
    %28 = arith.mulf %26, %27 : vector<2x8x1xf32>
    %29 = tpu.reciprocal %28 {approx = true} : vector<2x8x1xf32> -> vector<2x8x1xf32>
    %30 = vector.broadcast %29 : vector<2x8x1xf32> to vector<2x8x8xf32>
    %31 = arith.mulf %24, %30 : vector<2x8x8xf32>
    %32 = arith.truncf %31 : vector<2x8x8xf32> to vector<2x8x8xbf16>
    "tpu.trace_start"() <{level = 10 : i32, message = "bqk,bkd->bqd"}> : () -> ()
    %cst_9 = arith.constant dense<0.000000e+00> : vector<2x8x8xf32>
    %33 = tpu.matmul %32, %18, %cst_9 {dimension_numbers = #tpu.dot_dimension_numbers<[2], [1], [1], [2], [0, 0, 0, 1, 1, 2], [0], [0]>} : vector<2x8x8xbf16>, vector<2x8x8xbf16>, vector<2x8x8xf32> -> vector<2x8x8xf32>
    "tpu.trace_stop"() : () -> ()
    %34 = vector.extract_strided_slice %8 {offsets = [0, 0, 8], sizes = [2, 8, 8], strides = [1, 1, 1]} : vector<2x8x32xf32> to vector<2x8x8xf32>
    %35 = arith.truncf %34 : vector<2x8x8xf32> to vector<2x8x8xbf16>
    %36 = vector.extract_strided_slice %10 {offsets = [0, 0, 8], sizes = [2, 8, 8], strides = [1, 1, 1]} : vector<2x8x32xf32> to vector<2x8x8xf32>
    %37 = arith.truncf %36 : vector<2x8x8xf32> to vector<2x8x8xbf16>
    %38 = vector.extract_strided_slice %12 {offsets = [0, 0, 8], sizes = [2, 8, 8], strides = [1, 1, 1]} : vector<2x8x32xf32> to vector<2x8x8xf32>
    %39 = arith.truncf %38 : vector<2x8x8xf32> to vector<2x8x8xbf16>
    "tpu.trace_start"() <{level = 10 : i32, message = "bqd,bkd->bqk"}> : () -> ()
    %cst_10 = arith.constant dense<0.000000e+00> : vector<2x8x8xf32>
    %40 = tpu.matmul %35, %37, %cst_10 {dimension_numbers = #tpu.dot_dimension_numbers<[2], [2], [1], [1], [0, 0, 0, 1, 1, 1], [0], [0]>} : vector<2x8x8xbf16>, vector<2x8x8xbf16>, vector<2x8x8xf32> -> vector<2x8x8xf32>
    "tpu.trace_stop"() : () -> ()
    %cst_11 = arith.constant dense<0xFF800000> : vector<2x8xf32>
    %41 = vector.multi_reduction <maximumf>, %40, %cst_11 [2] : vector<2x8x8xf32> to vector<2x8xf32>
    %42 = vector.shape_cast %41 : vector<2x8xf32> to vector<2x8x1xf32>
    %43 = vector.broadcast %42 : vector<2x8x1xf32> to vector<2x8x8xf32>
    %44 = arith.subf %40, %43 : vector<2x8x8xf32>
    %45 = math.exp %44 : vector<2x8x8xf32>
    %cst_12 = arith.constant dense<0.000000e+00> : vector<2x8xf32>
    %46 = vector.multi_reduction <add>, %45, %cst_12 [2] : vector<2x8x8xf32> to vector<2x8xf32>
    %47 = vector.shape_cast %46 : vector<2x8xf32> to vector<2x8x1xf32>
    %cst_13 = arith.constant 5.65685415 : f32
    %48 = vector.broadcast %cst_13 : f32 to vector<2x8x1xf32>
    %49 = arith.mulf %47, %48 : vector<2x8x1xf32>
    %50 = tpu.reciprocal %49 {approx = true} : vector<2x8x1xf32> -> vector<2x8x1xf32>
    %51 = vector.broadcast %50 : vector<2x8x1xf32> to vector<2x8x8xf32>
    %52 = arith.mulf %45, %51 : vector<2x8x8xf32>
    %53 = arith.truncf %52 : vector<2x8x8xf32> to vector<2x8x8xbf16>
    "tpu.trace_start"() <{level = 10 : i32, message = "bqk,bkd->bqd"}> : () -> ()
    %cst_14 = arith.constant dense<0.000000e+00> : vector<2x8x8xf32>
    %54 = tpu.matmul %53, %39, %cst_14 {dimension_numbers = #tpu.dot_dimension_numbers<[2], [1], [1], [2], [0, 0, 0, 1, 1, 2], [0], [0]>} : vector<2x8x8xbf16>, vector<2x8x8xbf16>, vector<2x8x8xf32> -> vector<2x8x8xf32>
    "tpu.trace_stop"() : () -> ()
    %55 = vector.extract_strided_slice %8 {offsets = [0, 0, 16], sizes = [2, 8, 8], strides = [1, 1, 1]} : vector<2x8x32xf32> to vector<2x8x8xf32>
    %56 = arith.truncf %55 : vector<2x8x8xf32> to vector<2x8x8xbf16>
    %57 = vector.extract_strided_slice %10 {offsets = [0, 0, 16], sizes = [2, 8, 8], strides = [1, 1, 1]} : vector<2x8x32xf32> to vector<2x8x8xf32>
    %58 = arith.truncf %57 : vector<2x8x8xf32> to vector<2x8x8xbf16>
    %59 = vector.extract_strided_slice %12 {offsets = [0, 0, 16], sizes = [2, 8, 8], strides = [1, 1, 1]} : vector<2x8x32xf32> to vector<2x8x8xf32>
    %60 = arith.truncf %59 : vector<2x8x8xf32> to vector<2x8x8xbf16>
    "tpu.trace_start"() <{level = 10 : i32, message = "bqd,bkd->bqk"}> : () -> ()
    %cst_15 = arith.constant dense<0.000000e+00> : vector<2x8x8xf32>
    %61 = tpu.matmul %56, %58, %cst_15 {dimension_numbers = #tpu.dot_dimension_numbers<[2], [2], [1], [1], [0, 0, 0, 1, 1, 1], [0], [0]>} : vector<2x8x8xbf16>, vector<2x8x8xbf16>, vector<2x8x8xf32> -> vector<2x8x8xf32>
    "tpu.trace_stop"() : () -> ()
    %cst_16 = arith.constant dense<0xFF800000> : vector<2x8xf32>
    %62 = vector.multi_reduction <maximumf>, %61, %cst_16 [2] : vector<2x8x8xf32> to vector<2x8xf32>
    %63 = vector.shape_cast %62 : vector<2x8xf32> to vector<2x8x1xf32>
    %64 = vector.broadcast %63 : vector<2x8x1xf32> to vector<2x8x8xf32>
    %65 = arith.subf %61, %64 : vector<2x8x8xf32>
    %66 = math.exp %65 : vector<2x8x8xf32>
    %cst_17 = arith.constant dense<0.000000e+00> : vector<2x8xf32>
    %67 = vector.multi_reduction <add>, %66, %cst_17 [2] : vector<2x8x8xf32> to vector<2x8xf32>
    %68 = vector.shape_cast %67 : vector<2x8xf32> to vector<2x8x1xf32>
    %cst_18 = arith.constant 5.65685415 : f32
    %69 = vector.broadcast %cst_18 : f32 to vector<2x8x1xf32>
    %70 = arith.mulf %68, %69 : vector<2x8x1xf32>
    %71 = tpu.reciprocal %70 {approx = true} : vector<2x8x1xf32> -> vector<2x8x1xf32>
    %72 = vector.broadcast %71 : vector<2x8x1xf32> to vector<2x8x8xf32>
    %73 = arith.mulf %66, %72 : vector<2x8x8xf32>
    %74 = arith.truncf %73 : vector<2x8x8xf32> to vector<2x8x8xbf16>
    "tpu.trace_start"() <{level = 10 : i32, message = "bqk,bkd->bqd"}> : () -> ()
    %cst_19 = arith.constant dense<0.000000e+00> : vector<2x8x8xf32>
    %75 = tpu.matmul %74, %60, %cst_19 {dimension_numbers = #tpu.dot_dimension_numbers<[2], [1], [1], [2], [0, 0, 0, 1, 1, 2], [0], [0]>} : vector<2x8x8xbf16>, vector<2x8x8xbf16>, vector<2x8x8xf32> -> vector<2x8x8xf32>
    "tpu.trace_stop"() : () -> ()
    %76 = vector.extract_strided_slice %8 {offsets = [0, 0, 24], sizes = [2, 8, 8], strides = [1, 1, 1]} : vector<2x8x32xf32> to vector<2x8x8xf32>
    %77 = arith.truncf %76 : vector<2x8x8xf32> to vector<2x8x8xbf16>
    %78 = vector.extract_strided_slice %10 {offsets = [0, 0, 24], sizes = [2, 8, 8], strides = [1, 1, 1]} : vector<2x8x32xf32> to vector<2x8x8xf32>
    %79 = arith.truncf %78 : vector<2x8x8xf32> to vector<2x8x8xbf16>
    %80 = vector.extract_strided_slice %12 {offsets = [0, 0, 24], sizes = [2, 8, 8], strides = [1, 1, 1]} : vector<2x8x32xf32> to vector<2x8x8xf32>
    %81 = arith.truncf %80 : vector<2x8x8xf32> to vector<2x8x8xbf16>
    "tpu.trace_start"() <{level = 10 : i32, message = "bqd,bkd->bqk"}> : () -> ()
    %cst_20 = arith.constant dense<0.000000e+00> : vector<2x8x8xf32>
    %82 = tpu.matmul %77, %79, %cst_20 {dimension_numbers = #tpu.dot_dimension_numbers<[2], [2], [1], [1], [0, 0, 0, 1, 1, 1], [0], [0]>} : vector<2x8x8xbf16>, vector<2x8x8xbf16>, vector<2x8x8xf32> -> vector<2x8x8xf32>
    "tpu.trace_stop"() : () -> ()
    %cst_21 = arith.constant dense<0xFF800000> : vector<2x8xf32>
    %83 = vector.multi_reduction <maximumf>, %82, %cst_21 [2] : vector<2x8x8xf32> to vector<2x8xf32>
    %84 = vector.shape_cast %83 : vector<2x8xf32> to vector<2x8x1xf32>
    %85 = vector.broadcast %84 : vector<2x8x1xf32> to vector<2x8x8xf32>
    %86 = arith.subf %82, %85 : vector<2x8x8xf32>
    %87 = math.exp %86 : vector<2x8x8xf32>
    %cst_22 = arith.constant dense<0.000000e+00> : vector<2x8xf32>
    %88 = vector.multi_reduction <add>, %87, %cst_22 [2] : vector<2x8x8xf32> to vector<2x8xf32>
    %89 = vector.shape_cast %88 : vector<2x8xf32> to vector<2x8x1xf32>
    %cst_23 = arith.constant 5.65685415 : f32
    %90 = vector.broadcast %cst_23 : f32 to vector<2x8x1xf32>
    %91 = arith.mulf %89, %90 : vector<2x8x1xf32>
    %92 = tpu.reciprocal %91 {approx = true} : vector<2x8x1xf32> -> vector<2x8x1xf32>
    %93 = vector.broadcast %92 : vector<2x8x1xf32> to vector<2x8x8xf32>
    %94 = arith.mulf %87, %93 : vector<2x8x8xf32>
    %95 = arith.truncf %94 : vector<2x8x8xf32> to vector<2x8x8xbf16>
    "tpu.trace_start"() <{level = 10 : i32, message = "bqk,bkd->bqd"}> : () -> ()
    %cst_24 = arith.constant dense<0.000000e+00> : vector<2x8x8xf32>
    %96 = tpu.matmul %95, %81, %cst_24 {dimension_numbers = #tpu.dot_dimension_numbers<[2], [1], [1], [2], [0, 0, 0, 1, 1, 2], [0], [0]>} : vector<2x8x8xbf16>, vector<2x8x8xbf16>, vector<2x8x8xf32> -> vector<2x8x8xf32>
    "tpu.trace_stop"() : () -> ()
    %97 = tpu.concatenate %33, %54, %75, %96 in 2 : vector<2x8x8xf32>, vector<2x8x8xf32>, vector<2x8x8xf32>, vector<2x8x8xf32> -> vector<2x8x32xf32>
    %98 = vector.shape_cast %97 : vector<2x8x32xf32> to vector<16x32xf32>
    %99 = arith.truncf %98 : vector<16x32xf32> to vector<16x32xbf16>
    %c0_25 = arith.constant 0 : index
    %c0_26 = arith.constant 0 : index
    %100 = vector.load %arg4[%c0_25, %c0_26] : memref<32x32xbf16, #tpu.memory_space<vmem>>, vector<32x32xbf16>
    %cst_27 = arith.constant dense<0.000000e+00> : vector<16x32xf32>
    %101 = tpu.matmul %99, %100, %cst_27 {dimension_numbers = #tpu.dot_dimension_numbers<[1], [0], [0], [1], [0, 0, 1, 1], [], []>} : vector<16x32xbf16>, vector<32x32xbf16>, vector<16x32xf32> -> vector<16x32xf32>
    %c0_28 = arith.constant 0 : index
    %c0_29 = arith.constant 0 : index
    %102 = vector.load %arg5[%c0_28, %c0_29] : memref<1x32xf32, #tpu.memory_space<vmem>>, vector<1x32xf32>
    %103 = vector.broadcast %102 : vector<1x32xf32> to vector<16x32xf32>
    %104 = arith.addf %101, %103 : vector<16x32xf32>
    %105 = arith.addf %104, %0 : vector<16x32xf32>
    %c0_30 = arith.constant 0 : index
    %c0_31 = arith.constant 0 : index
    %106 = vector.load %arg6[%c0_30, %c0_31] : memref<16x32xf32, #tpu.memory_space<vmem>>, vector<16x32xf32>
    tpu.vector_store %arg6[%c0_30, %c0_31], %105 {strides = array<i32>} : memref<16x32xf32, #tpu.memory_space<vmem>>, vector<16x32xf32>,
    return
  }
  func.func @transform_0(%arg0: i32) -> (i32, i32) {
    %c0_i32 = arith.constant 0 : i32
    %c0_i32_0 = arith.constant 0 : i32
    return %arg0, %c0_i32 : i32, i32
  }
  func.func @transform_1(%arg0: i32) -> (i32, i32) {
    %c0_i32 = arith.constant 0 : i32
    %c0_i32_0 = arith.constant 0 : i32
    %c0_i32_1 = arith.constant 0 : i32
    return %c0_i32, %c0_i32_0 : i32, i32
  }
  func.func @transform_2(%arg0: i32) -> (i32, i32) {
    %c0_i32 = arith.constant 0 : i32
    %c0_i32_0 = arith.constant 0 : i32
    %c0_i32_1 = arith.constant 0 : i32
    return %c0_i32, %c0_i32_0 : i32, i32
  }
  func.func @transform_3(%arg0: i32) -> (i32, i32) {
    %c0_i32 = arith.constant 0 : i32
    %c0_i32_0 = arith.constant 0 : i32
    %c0_i32_1 = arith.constant 0 : i32
    return %c0_i32, %c0_i32_0 : i32, i32
  }
  func.func @transform_4(%arg0: i32) -> (i32, i32) {
    %c0_i32 = arith.constant 0 : i32
    %c0_i32_0 = arith.constant 0 : i32
    %c0_i32_1 = arith.constant 0 : i32
    return %c0_i32, %c0_i32_0 : i32, i32
  }
  func.func @transform_5(%arg0: i32) -> (i32, i32) {
    %c0_i32 = arith.constant 0 : i32
    %c0_i32_0 = arith.constant 0 : i32
    return %arg0, %c0_i32 : i32, i32
  }
}

</mosaic_0001>

<llo_original>
// kernel: tpu_custom_call.1
$region0: #{tpu_custom_call.1}
  #allocation0 [shape = 'u32[]', space=smem, size = 0x4, offset = 0x4, fixed_abs, tag = 'smem constant byte address 0x4 - core index']
  #allocation1 [shape = 'u32[144,128]{1,0:T(1,128)}', space=vmem, size = 0x12000, scoped, tag = 'internal scratch']
  %s0 = inlined_call_operand.hbm [shape: f32[16,32], index: 0, kind: input, shape index: {}]
  %s1 = inlined_call_operand.hbm [shape: bf16[32,96], index: 1, kind: input, shape index: {}]
  %s2 = inlined_call_operand.vmem [shape: f32[1,96], index: 2, kind: input, shape index: {}]
  %s3 = inlined_call_operand.hbm [shape: bf16[32,32], index: 3, kind: input, shape index: {}]
  %s4 = inlined_call_operand.vmem [shape: f32[1,32], index: 4, kind: input, shape index: {}]
  %s5 = inlined_call_operand.hbm [shape: f32[16,32], index: 5, kind: output, shape index: {}]
  %s6 = sld [smem:[#allocation0]]
  $region42: #{tpu_custom_call.1} parent=0
    _
  %s8 = ssub.s32 1, %s6
  %s9 = scalar_select 0, %s8, %s6
  $region1: #{tpu_custom_call.1} parent=0
    #allocation2 [shape = 'u8[8192]{0}', space=vmem, size = 0x2000, scoped, tag = 'input window, operand 0, single buffered']
    #allocation3 [shape = 's32[1]{0}', space=sflag, size = 0x4, scoped, tag = 'scoped memory for tpu_custom_call.1']
    #allocation4 [shape = 's32[1]{0}', space=sflag, size = 0x4, scoped, tag = 'scoped memory for tpu_custom_call.1']
    #allocation5 [shape = 'u8[8192]{0}', space=vmem, size = 0x2000, scoped, tag = 'input window, operand 1, single buffered']
    #allocation6 [shape = 's32[1]{0}', space=sflag, size = 0x4, scoped, tag = 'scoped memory for tpu_custom_call.1']
    #allocation7 [shape = 'u8[8192]{0}', space=vmem, size = 0x2000, scoped, tag = 'input window, operand 3, single buffered']
    #allocation8 [shape = 'u8[8192]{0}', space=vmem, size = 0x2000, scoped, tag = 'output window, operand 0, single buffered']
    %10 = vsyncpa [#allocation3], 0
    %11 = vsyncpa [#allocation6], 0
    %12 = vsyncpa [#allocation4], 0
    // Predicated region
    $region2: #{tpu_custom_call.1} parent=1 // pred_check
      _
    $region3: #{tpu_custom_call.1} parent=1 // pred_check_branch
      %14 = sbr.rel (0) target = $region5
    $region4: #{tpu_custom_call.1} parent=1 // pred_region
      %s16 = ssub.s32 256, 256
      %17 = vsyncadd [#allocation3], %s16
      %s18 = sshll.u32 [#allocation2], 4
      %s19 = int_to_ptr.vmem [resolvable:$true] %s18
      %24 = dma.hbm_to_vmem [thread:$0]  %s0, 256, %s19, [#allocation3], 128, 128, 8
    $region5: #{tpu_custom_call.1} parent=1 // pred_fallthru
      _
    // Predicated region
    $region6: #{tpu_custom_call.1} parent=1 // pred_check
      _
    $region7: #{tpu_custom_call.1} parent=1 // pred_check_branch
      %26 = sbr.rel (0) target = $region9
    $region8: #{tpu_custom_call.1} parent=1 // pred_region
      %s28 = ssub.s32 256, 256
      %29 = vsyncadd [#allocation6], %s28
      %s30 = sshll.u32 [#allocation5], 4
      %s31 = int_to_ptr.vmem [resolvable:$true] %s30
      %36 = dma.hbm_to_vmem [thread:$0]  %s1, 256, %s31, [#allocation6], 64, 64, 4
    $region9: #{tpu_custom_call.1} parent=1 // pred_fallthru
      _
    // Predicated region
    $region10: #{tpu_custom_call.1} parent=1 // pred_check
      _
    $region11: #{tpu_custom_call.1} parent=1 // pred_check_branch
      %38 = sbr.rel (0) target = $region13
    $region12: #{tpu_custom_call.1} parent=1 // pred_region
      _
    $region13: #{tpu_custom_call.1} parent=1 // pred_fallthru
      _
    // Predicated region
    $region14: #{tpu_custom_call.1} parent=1 // pred_check
      _
    $region15: #{tpu_custom_call.1} parent=1 // pred_check_branch
      %40 = sbr.rel (0) target = $region17
    $region16: #{tpu_custom_call.1} parent=1 // pred_region
      %s42 = ssub.s32 256, 256
      %43 = vsyncadd [#allocation6], %s42
      %s44 = sshll.u32 [#allocation7], 4
      %s45 = int_to_ptr.vmem [resolvable:$true] %s44
      %50 = dma.hbm_to_vmem [thread:$0]  %s3, 256, %s45, [#allocation6], 64, 64, 4
    $region17: #{tpu_custom_call.1} parent=1 // pred_fallthru
      _
    // Predicated region
    $region18: #{tpu_custom_call.1} parent=1 // pred_check
      _
    $region19: #{tpu_custom_call.1} parent=1 // pred_check_branch
      %52 = sbr.rel (0) target = $region21
    $region20: #{tpu_custom_call.1} parent=1 // pred_region
      _
    $region21: #{tpu_custom_call.1} parent=1 // pred_fallthru
      _
    // Predicated region
    $region22: #{tpu_custom_call.1} parent=1 // pred_check
      _
    $region23: #{tpu_custom_call.1} parent=1 // pred_check_branch
      %54 = sbr.rel (0) target = $region25
    $region24: #{tpu_custom_call.1} parent=1 // pred_region
      %55 = dma.done [#allocation3], 256
    $region25: #{tpu_custom_call.1} parent=1 // pred_fallthru
      _
    // Predicated region
    $region26: #{tpu_custom_call.1} parent=1 // pred_check
      _
    $region27: #{tpu_custom_call.1} parent=1 // pred_check_branch
      %57 = sbr.rel (0) target = $region29
    $region28: #{tpu_custom_call.1} parent=1 // pred_region
      %58 = dma.done [#allocation6], 256
    $region29: #{tpu_custom_call.1} parent=1 // pred_fallthru
      _
    // Predicated region
    $region30: #{tpu_custom_call.1} parent=1 // pred_check
      _
    $region31: #{tpu_custom_call.1} parent=1 // pred_check_branch
      %60 = sbr.rel (0) target = $region33
    $region32: #{tpu_custom_call.1} parent=1 // pred_region
      %61 = dma.done [#allocation6], 256
    $region33: #{tpu_custom_call.1} parent=1 // pred_fallthru
      _
    %v63 = vld [vmem:[#allocation2] sm:$0xff]
    %v64 = vld [vmem:[#allocation2 + $0x8] sm:$0xff]
    %v65 = vpack.c.bf16 %v64, %v63
    %v66 = vld [vmem:[#allocation5] sm:$0xf]
    %v67 = vld [vmem:[#allocation5 + $0x4] sm:$0xf]
    %v68 = vld [vmem:[#allocation5 + $0x8] sm:$0xf]
    %v69 = vld [vmem:[#allocation5 + $0xc] sm:$0xf]
    %v70 = vld [vmem:[%s2] sm:$0x1]
    %v72 = vlaneseq
    %v73 = vshrl.u32 %v72, 7
    %v74 = vsub.s32 0, %v73
    %v75 = vrot.slane %v70, %v74
    %v81 = vunpack.c.l.b16 %v66
    %v82 = vunpack.c.l.b16 %v67
    %v83 = vunpack.c.l.b16 %v68
    %v84 = vunpack.c.l.b16 %v69
    %v85 = vpack.c.b16 %v82, %v81
    %v86 = vpack.c.b16 %v84, %v83
    %vm89 = vcmask 261120
    %v91 = vsel %vm89, %v65, 0
    %93 = vmatprep.subr.bf16.mxu0 0
    %94 = vmatpush1.bf16.msra.mxu0 %v85
    %95 = vmatprep.subr.bf16.mxu0 0
    %96 = vmatpush1.bf16.msra.mxu0 %v86
    %97 = vmatprep.subr.bf16.mxu0 0
    %98 = vmatpush1.bf16.msra.mxu0 0
    %99 = vmatprep.subr.bf16.mxu0 0
    %100 = vmatpush1.bf16.msra.mxu0 0
    %101 = vmatprep.subr.bf16.mxu0 0
    %102 = vmatpush1.bf16.msra.mxu0 0
    %103 = vmatprep.subr.bf16.mxu0 0
    %104 = vmatpush1.bf16.msra.mxu0 0
    %105 = vmatprep.subr.bf16.mxu0 0
    %106 = vmatpush1.bf16.msra.mxu0 0
    %107 = vmatprep.subr.bf16.mxu0 0
    %108 = vmatpush1.bf16.msra.mxu0 0
    %109 = vmatprep.subr.bf16.mxu0 0
    %110 = vmatpush1.bf16.msra.mxu0 0
    %111 = vmatprep.subr.bf16.mxu0 0
    %112 = vmatpush1.bf16.msra.mxu0 0
    %113 = vmatprep.subr.bf16.mxu0 0
    %114 = vmatpush1.bf16.msra.mxu0 0
    %115 = vmatprep.subr.bf16.mxu0 0
    %116 = vmatpush1.bf16.msra.mxu0 0
    %117 = vmatprep.subr.bf16.mxu0 0
    %118 = vmatpush1.bf16.msra.mxu0 0
    %119 = vmatprep.subr.bf16.mxu0 0
    %120 = vmatpush1.bf16.msra.mxu0 0
    %121 = vmatprep.subr.bf16.mxu0 0
    %122 = vmatpush1.bf16.msra.mxu0 0
    %123 = vmatprep.subr.bf16.mxu0 0
    %124 = vmatpush1.bf16.msra.mxu0 0
    %125 = vmatprep.mubr.bf16.mxu0 0
    %126 = vmatmul.mubr.bf16.gmra.mrb[0].mxu0 %v91
    %v127 = vpop.f32.mrb[0].mxu0
    %v128 = vadd.f32 %v75, %v127
    %v129 = vpop.f32.mrb[0].mxu0
    %v130 = vpop.f32.mrb[0].mxu0
    %v131 = vadd.f32 %v75, %v130
    %v132 = vpop.f32.mrb[0].mxu0
    %133 = vdwg.mxu0
    %v134 = vpack.c.bf16 %v128, %v128
    %v135 = vpack.c.bf16 %v131, %v131
    %137 = vrot.lane.b32.xlu0 %v134, 96
    %v138 = vpop.permute.xlu0 %137
    %vm139 = vcmask 64512
    %v141 = vsel %vm139, %v134, 0
    %v144 = vsel %vm139, %v138, 0
    %146 = vmatprep.subr.bf16.mxu0 0
    %147 = vmatpush1.bf16.xpose.msra.mxu0 %v144
    %148 = vmatprep.subr.bf16.mxu0 0
    %149 = vmatpush1.bf16.xpose.msra.mxu0 0
    %150 = vmatprep.subr.bf16.mxu0 0
    %151 = vmatpush1.bf16.xpose.msra.mxu0 0
    %152 = vmatprep.subr.bf16.mxu0 0
    %153 = vmatpush1.bf16.xpose.msra.mxu0 0
    %154 = vmatprep.subr.bf16.mxu0 0
    %155 = vmatpush1.bf16.xpose.msra.mxu0 0
    %156 = vmatprep.subr.bf16.mxu0 0
    %157 = vmatpush1.bf16.xpose.msra.mxu0 0
    %158 = vmatprep.subr.bf16.mxu0 0
    %159 = vmatpush1.bf16.xpose.msra.mxu0 0
    %160 = vmatprep.subr.bf16.mxu0 0
    %161 = vmatpush1.bf16.xpose.msra.mxu0 0
    %162 = vmatprep.subr.bf16.mxu0 0
    %163 = vmatpush1.bf16.xpose.msra.mxu0 0
    %164 = vmatprep.subr.bf16.mxu0 0
    %165 = vmatpush1.bf16.xpose.msra.mxu0 0
    %166 = vmatprep.subr.bf16.mxu0 0
    %167 = vmatpush1.bf16.xpose.msra.mxu0 0
    %168 = vmatprep.subr.bf16.mxu0 0
    %169 = vmatpush1.bf16.xpose.msra.mxu0 0
    %170 = vmatprep.subr.bf16.mxu0 0
    %171 = vmatpush1.bf16.xpose.msra.mxu0 0
    %172 = vmatprep.subr.bf16.mxu0 0
    %173 = vmatpush1.bf16.xpose.msra.mxu0 0
    %174 = vmatprep.subr.bf16.mxu0 0
    %175 = vmatpush1.bf16.xpose.msra.mxu0 0
    %176 = vmatprep.subr.bf16.mxu0 0
    %177 = vmatpush1.bf16.xpose.msra.mxu0 0
    %178 = vmatprep.mubr.bf16.mxu0 0
    %179 = vmatmul.mubr.bf16.gmra.mrb[0].mxu0 %v141
    %v180 = vpop.f32.mrb[0].mxu0
    %v181 = vadd.f32 0.0, %v180
    %v182 = vpop.f32.mrb[0].mxu0
    %v183 = vpop.f32.mrb[0].mxu0
    %v184 = vpop.f32.mrb[0].mxu0
    %185 = vdwg.mxu0
    %187 = vrot.lane.b32.xlu0 %v135, 96
    %v188 = vpop.permute.xlu0 %187
    %v190 = vsel %vm139, %v135, 0
    %v193 = vsel %vm139, %v188, 0
    %195 = vmatprep.subr.bf16.mxu0 0
    %196 = vmatpush1.bf16.xpose.msra.mxu0 %v193
    %197 = vmatprep.subr.bf16.mxu0 0
    %198 = vmatpush1.bf16.xpose.msra.mxu0 0
    %199 = vmatprep.subr.bf16.mxu0 0
    %200 = vmatpush1.bf16.xpose.msra.mxu0 0
    %201 = vmatprep.subr.bf16.mxu0 0
    %202 = vmatpush1.bf16.xpose.msra.mxu0 0
    %203 = vmatprep.subr.bf16.mxu0 0
    %204 = vmatpush1.bf16.xpose.msra.mxu0 0
    %205 = vmatprep.subr.bf16.mxu0 0
    %206 = vmatpush1.bf16.xpose.msra.mxu0 0
    %207 = vmatprep.subr.bf16.mxu0 0
    %208 = vmatpush1.bf16.xpose.msra.mxu0 0
    %209 = vmatprep.subr.bf16.mxu0 0
    %210 = vmatpush1.bf16.xpose.msra.mxu0 0
    %211 = vmatprep.subr.bf16.mxu0 0
    %212 = vmatpush1.bf16.xpose.msra.mxu0 0
    %213 = vmatprep.subr.bf16.mxu0 0
    %214 = vmatpush1.bf16.xpose.msra.mxu0 0
    %215 = vmatprep.subr.bf16.mxu0 0
    %216 = vmatpush1.bf16.xpose.msra.mxu0 0
    %217 = vmatprep.subr.bf16.mxu0 0
    %218 = vmatpush1.bf16.xpose.msra.mxu0 0
    %219 = vmatprep.subr.bf16.mxu0 0
    %220 = vmatpush1.bf16.xpose.msra.mxu0 0
    %221 = vmatprep.subr.bf16.mxu0 0
    %222 = vmatpush1.bf16.xpose.msra.mxu0 0
    %223 = vmatprep.subr.bf16.mxu0 0
    %224 = vmatpush1.bf16.xpose.msra.mxu0 0
    %225 = vmatprep.subr.bf16.mxu0 0
    %226 = vmatpush1.bf16.xpose.msra.mxu0 0
    %227 = vmatprep.mubr.bf16.mxu0 0
    %228 = vmatmul.mubr.bf16.gmra.mrb[0].mxu0 %v190
    %v229 = vpop.f32.mrb[0].mxu0
    %v230 = vadd.f32 0.0, %v229
    %v231 = vpop.f32.mrb[0].mxu0
    %v232 = vpop.f32.mrb[0].mxu0
    %v233 = vpop.f32.mrb[0].mxu0
    %234 = vdwg.mxu0
    %v235 = vsel %vm139, %v181, -inf
    %236 = vmax.xlane.f32.xlu0 %v235
    %v237 = vpop.xlane.xlu0 %236
    %v238 = vsel %vm139, %v230, -inf
    %239 = vmax.xlane.f32.xlu0 %v238
    %v240 = vpop.xlane.xlu0 %239
    %v241 = vsub.f32 %v181, %v237
    %v242 = vsub.f32 %v230, %v240
    %v243 = vmul.f32 %v241, 1.442695
    %v244 = vpow.pop %v243
    %v245 = vmul.f32 %v242, 1.442695
    %v246 = vpow.pop %v245
    %v247 = vsel %vm139, %v244, 0.0
    %248 = vadd.xlane.f32.xlu0 %v247
    %v249 = vpop.xlane.xlu0 %248
    %v250 = vsel %vm139, %v246, 0.0
    %251 = vadd.xlane.f32.xlu0 %v250
    %v252 = vpop.xlane.xlu0 %251
    %v253 = vmul.f32 %v249, 5.656854
    %v254 = vmul.f32 %v252, 5.656854
    %v255 = vrcp.pop %v253
    %v256 = vrcp.pop %v254
    %v257 = vmul.f32 %v244, %v255
    %v258 = vmul.f32 %v246, %v256
    %v259 = vpack.c.bf16 %v257, %v257
    %v260 = vpack.c.bf16 %v258, %v258
    %261 = vrot.lane.b32.xlu0 %v134, 64
    %v262 = vpop.permute.xlu0 %261
    %v264 = vsel %vm139, %v259, 0
    %vm266 = vcmask 1043456
    %v268 = vsel %vm266, %v262, 0
    %270 = vmatprep.subr.bf16.mxu0 0
    %271 = vmatpush1.bf16.msra.mxu0 %v268
    %272 = vmatprep.subr.bf16.mxu0 0
    %273 = vmatpush1.bf16.msra.mxu0 0
    %274 = vmatprep.subr.bf16.mxu0 0
    %275 = vmatpush1.bf16.msra.mxu0 0
    %276 = vmatprep.subr.bf16.mxu0 0
    %277 = vmatpush1.bf16.msra.mxu0 0
    %278 = vmatprep.subr.bf16.mxu0 0
    %279 = vmatpush1.bf16.msra.mxu0 0
    %280 = vmatprep.subr.bf16.mxu0 0
    %281 = vmatpush1.bf16.msra.mxu0 0
    %282 = vmatprep.subr.bf16.mxu0 0
    %283 = vmatpush1.bf16.msra.mxu0 0
    %284 = vmatprep.subr.bf16.mxu0 0
    %285 = vmatpush1.bf16.msra.mxu0 0
    %286 = vmatprep.subr.bf16.mxu0 0
    %287 = vmatpush1.bf16.msra.mxu0 0
    %288 = vmatprep.subr.bf16.mxu0 0
    %289 = vmatpush1.bf16.msra.mxu0 0
    %290 = vmatprep.subr.bf16.mxu0 0
    %291 = vmatpush1.bf16.msra.mxu0 0
    %292 = vmatprep.subr.bf16.mxu0 0
    %293 = vmatpush1.bf16.msra.mxu0 0
    %294 = vmatprep.subr.bf16.mxu0 0
    %295 = vmatpush1.bf16.msra.mxu0 0
    %296 = vmatprep.subr.bf16.mxu0 0
    %297 = vmatpush1.bf16.msra.mxu0 0
    %298 = vmatprep.subr.bf16.mxu0 0
    %299 = vmatpush1.bf16.msra.mxu0 0
    %300 = vmatprep.subr.bf16.mxu0 0
    %301 = vmatpush1.bf16.msra.mxu0 0
    %302 = vmatprep.mubr.bf16.mxu0 0
    %303 = vmatmul.mubr.bf16.gmra.mrb[0].mxu0 %v264
    %v304 = vpop.f32.mrb[0].mxu0
    %v305 = vadd.f32 0.0, %v304
    %v306 = vpop.f32.mrb[0].mxu0
    %v307 = vpop.f32.mrb[0].mxu0
    %v308 = vpop.f32.mrb[0].mxu0
    %309 = vdwg.mxu0
    %310 = vrot.lane.b32.xlu0 %v135, 64
    %v311 = vpop.permute.xlu0 %310
    %v313 = vsel %vm139, %v260, 0
    %v316 = vsel %vm266, %v311, 0
    %318 = vmatprep.subr.bf16.mxu0 0
    %319 = vmatpush1.bf16.msra.mxu0 %v316
    %320 = vmatprep.subr.bf16.mxu0 0
    %321 = vmatpush1.bf16.msra.mxu0 0
    %322 = vmatprep.subr.bf16.mxu0 0
    %323 = vmatpush1.bf16.msra.mxu0 0
    %324 = vmatprep.subr.bf16.mxu0 0
    %325 = vmatpush1.bf16.msra.mxu0 0
    %326 = vmatprep.subr.bf16.mxu0 0
    %327 = vmatpush1.bf16.msra.mxu0 0
    %328 = vmatprep.subr.bf16.mxu0 0
    %329 = vmatpush1.bf16.msra.mxu0 0
    %330 = vmatprep.subr.bf16.mxu0 0
    %331 = vmatpush1.bf16.msra.mxu0 0
    %332 = vmatprep.subr.bf16.mxu0 0
    %333 = vmatpush1.bf16.msra.mxu0 0
    %334 = vmatprep.subr.bf16.mxu0 0
    %335 = vmatpush1.bf16.msra.mxu0 0
    %336 = vmatprep.subr.bf16.mxu0 0
    %337 = vmatpush1.bf16.msra.mxu0 0
    %338 = vmatprep.subr.bf16.mxu0 0
    %339 = vmatpush1.bf16.msra.mxu0 0
    %340 = vmatprep.subr.bf16.mxu0 0
    %341 = vmatpush1.bf16.msra.mxu0 0
    %342 = vmatprep.subr.bf16.mxu0 0
    %343 = vmatpush1.bf16.msra.mxu0 0
    %344 = vmatprep.subr.bf16.mxu0 0
    %345 = vmatpush1.bf16.msra.mxu0 0
    %346 = vmatprep.subr.bf16.mxu0 0
    %347 = vmatpush1.bf16.msra.mxu0 0
    %348 = vmatprep.subr.bf16.mxu0 0
    %349 = vmatpush1.bf16.msra.mxu0 0
    %350 = vmatprep.mubr.bf16.mxu0 0
    %351 = vmatmul.mubr.bf16.gmra.mrb[0].mxu0 %v313
    %v352 = vpop.f32.mrb[0].mxu0
    %v353 = vadd.f32 0.0, %v352
    %v354 = vpop.f32.mrb[0].mxu0
    %v355 = vpop.f32.mrb[0].mxu0
    %v356 = vpop.f32.mrb[0].mxu0
    %357 = vdwg.mxu0
    %358 = vrot.lane.b32.xlu0 %v134, 120
    %v359 = vpop.permute.xlu0 %358
    %360 = vrot.lane.b32.xlu0 %v134, 88
    %v361 = vpop.permute.xlu0 %360
    %v363 = vsel %vm139, %v359, 0
    %v366 = vsel %vm139, %v361, 0
    %368 = vmatprep.subr.bf16.mxu0 0
    %369 = vmatpush1.bf16.xpose.msra.mxu0 %v366
    %370 = vmatprep.subr.bf16.mxu0 0
    %371 = vmatpush1.bf16.xpose.msra.mxu0 0
    %372 = vmatprep.subr.bf16.mxu0 0
    %373 = vmatpush1.bf16.xpose.msra.mxu0 0
    %374 = vmatprep.subr.bf16.mxu0 0
    %375 = vmatpush1.bf16.xpose.msra.mxu0 0
    %376 = vmatprep.subr.bf16.mxu0 0
    %377 = vmatpush1.bf16.xpose.msra.mxu0 0
    %378 = vmatprep.subr.bf16.mxu0 0
    %379 = vmatpush1.bf16.xpose.msra.mxu0 0
    %380 = vmatprep.subr.bf16.mxu0 0
    %381 = vmatpush1.bf16.xpose.msra.mxu0 0
    %382 = vmatprep.subr.bf16.mxu0 0
    %383 = vmatpush1.bf16.xpose.msra.mxu0 0
    %384 = vmatprep.subr.bf16.mxu0 0
    %385 = vmatpush1.bf16.xpose.msra.mxu0 0
    %386 = vmatprep.subr.bf16.mxu0 0
    %387 = vmatpush1.bf16.xpose.msra.mxu0 0
    %388 = vmatprep.subr.bf16.mxu0 0
    %389 = vmatpush1.bf16.xpose.msra.mxu0 0
    %390 = vmatprep.subr.bf16.mxu0 0
    %391 = vmatpush1.bf16.xpose.msra.mxu0 0
    %392 = vmatprep.subr.bf16.mxu0 0
    %393 = vmatpush1.bf16.xpose.msra.mxu0 0
    %394 = vmatprep.subr.bf16.mxu0 0
    %395 = vmatpush1.bf16.xpose.msra.mxu0 0
    %396 = vmatprep.subr.bf16.mxu0 0
    %397 = vmatpush1.bf16.xpose.msra.mxu0 0
    %398 = vmatprep.subr.bf16.mxu0 0
    %399 = vmatpush1.bf16.xpose.msra.mxu0 0
    %400 = vmatprep.mubr.bf16.mxu0 0
    %401 = vmatmul.mubr.bf16.gmra.mrb[0].mxu0 %v363
    %v402 = vpop.f32.mrb[0].mxu0
    %v403 = vadd.f32 0.0, %v402
    %v404 = vpop.f32.mrb[0].mxu0
    %v405 = vpop.f32.mrb[0].mxu0
    %v406 = vpop.f32.mrb[0].mxu0
    %407 = vdwg.mxu0
    %408 = vrot.lane.b32.xlu0 %v135, 120
    %v409 = vpop.permute.xlu0 %408
    %410 = vrot.lane.b32.xlu0 %v135, 88
    %v411 = vpop.permute.xlu0 %410
    %v413 = vsel %vm139, %v409, 0
    %v416 = vsel %vm139, %v411, 0
    %418 = vmatprep.subr.bf16.mxu0 0
    %419 = vmatpush1.bf16.xpose.msra.mxu0 %v416
    %420 = vmatprep.subr.bf16.mxu0 0
    %421 = vmatpush1.bf16.xpose.msra.mxu0 0
    %422 = vmatprep.subr.bf16.mxu0 0
    %423 = vmatpush1.bf16.xpose.msra.mxu0 0
    %424 = vmatprep.subr.bf16.mxu0 0
    %425 = vmatpush1.bf16.xpose.msra.mxu0 0
    %426 = vmatprep.subr.bf16.mxu0 0
    %427 = vmatpush1.bf16.xpose.msra.mxu0 0
    %428 = vmatprep.subr.bf16.mxu0 0
    %429 = vmatpush1.bf16.xpose.msra.mxu0 0
    %430 = vmatprep.subr.bf16.mxu0 0
    %431 = vmatpush1.bf16.xpose.msra.mxu0 0
    %432 = vmatprep.subr.bf16.mxu0 0
    %433 = vmatpush1.bf16.xpose.msra.mxu0 0
    %434 = vmatprep.subr.bf16.mxu0 0
    %435 = vmatpush1.bf16.xpose.msra.mxu0 0
    %436 = vmatprep.subr.bf16.mxu0 0
    %437 = vmatpush1.bf16.xpose.msra.mxu0 0
    %438 = vmatprep.subr.bf16.mxu0 0
    %439 = vmatpush1.bf16.xpose.msra.mxu0 0
    %440 = vmatprep.subr.bf16.mxu0 0
    %441 = vmatpush1.bf16.xpose.msra.mxu0 0
    %442 = vmatprep.subr.bf16.mxu0 0
    %443 = vmatpush1.bf16.xpose.msra.mxu0 0
    %444 = vmatprep.subr.bf16.mxu0 0
    %445 = vmatpush1.bf16.xpose.msra.mxu0 0
    %446 = vmatprep.subr.bf16.mxu0 0
    %447 = vmatpush1.bf16.xpose.msra.mxu0 0
    %448 = vmatprep.subr.bf16.mxu0 0
    %449 = vmatpush1.bf16.xpose.msra.mxu0 0
    %450 = vmatprep.mubr.bf16.mxu0 0
    %451 = vmatmul.mubr.bf16.gmra.mrb[0].mxu0 %v413
    %v452 = vpop.f32.mrb[0].mxu0
    %v453 = vadd.f32 0.0, %v452
    %v454 = vpop.f32.mrb[0].mxu0
    %v455 = vpop.f32.mrb[0].mxu0
    %v456 = vpop.f32.mrb[0].mxu0
    %457 = vdwg.mxu0
    %v458 = vsel %vm139, %v403, -inf
    %459 = vmax.xlane.f32.xlu0 %v458
    %v460 = vpop.xlane.xlu0 %459
    %v461 = vsel %vm139, %v453, -inf
    %462 = vmax.xlane.f32.xlu0 %v461
    %v463 = vpop.xlane.xlu0 %462
    %v464 = vsub.f32 %v403, %v460
    %v465 = vsub.f32 %v453, %v463
    %v466 = vmul.f32 %v464, 1.442695
    %v467 = vpow.pop %v466
    %v468 = vmul.f32 %v465, 1.442695
    %v469 = vpow.pop %v468
    %v470 = vsel %vm139, %v467, 0.0
    %471 = vadd.xlane.f32.xlu0 %v470
    %v472 = vpop.xlane.xlu0 %471
    %v473 = vsel %vm139, %v469, 0.0
    %474 = vadd.xlane.f32.xlu0 %v473
    %v475 = vpop.xlane.xlu0 %474
    %v476 = vmul.f32 %v472, 5.656854
    %v477 = vmul.f32 %v475, 5.656854
    %v478 = vrcp.pop %v476
    %v479 = vrcp.pop %v477
    %v480 = vmul.f32 %v467, %v478
    %v481 = vmul.f32 %v469, %v479
    %v482 = vpack.c.bf16 %v480, %v480
    %v483 = vpack.c.bf16 %v481, %v481
    %484 = vrot.lane.b32.xlu0 %v134, 56
    %v485 = vpop.permute.xlu0 %484
    %v487 = vsel %vm139, %v482, 0
    %v490 = vsel %vm266, %v485, 0
    %492 = vmatprep.subr.bf16.mxu0 0
    %493 = vmatpush1.bf16.msra.mxu0 %v490
    %494 = vmatprep.subr.bf16.mxu0 0
    %495 = vmatpush1.bf16.msra.mxu0 0
    %496 = vmatprep.subr.bf16.mxu0 0
    %497 = vmatpush1.bf16.msra.mxu0 0
    %498 = vmatprep.subr.bf16.mxu0 0
    %499 = vmatpush1.bf16.msra.mxu0 0
    %500 = vmatprep.subr.bf16.mxu0 0
    %501 = vmatpush1.bf16.msra.mxu0 0
    %502 = vmatprep.subr.bf16.mxu0 0
    %503 = vmatpush1.bf16.msra.mxu0 0
    %504 = vmatprep.subr.bf16.mxu0 0
    %505 = vmatpush1.bf16.msra.mxu0 0
    %506 = vmatprep.subr.bf16.mxu0 0
    %507 = vmatpush1.bf16.msra.mxu0 0
    %508 = vmatprep.subr.bf16.mxu0 0
    %509 = vmatpush1.bf16.msra.mxu0 0
    %510 = vmatprep.subr.bf16.mxu0 0
    %511 = vmatpush1.bf16.msra.mxu0 0
    %512 = vmatprep.subr.bf16.mxu0 0
    %513 = vmatpush1.bf16.msra.mxu0 0
    %514 = vmatprep.subr.bf16.mxu0 0
    %515 = vmatpush1.bf16.msra.mxu0 0
    %516 = vmatprep.subr.bf16.mxu0 0
    %517 = vmatpush1.bf16.msra.mxu0 0
    %518 = vmatprep.subr.bf16.mxu0 0
    %519 = vmatpush1.bf16.msra.mxu0 0
    %520 = vmatprep.subr.bf16.mxu0 0
    %521 = vmatpush1.bf16.msra.mxu0 0
    %522 = vmatprep.subr.bf16.mxu0 0
    %523 = vmatpush1.bf16.msra.mxu0 0
    %524 = vmatprep.mubr.bf16.mxu0 0
    %525 = vmatmul.mubr.bf16.gmra.mrb[0].mxu0 %v487
    %v526 = vpop.f32.mrb[0].mxu0
    %v527 = vadd.f32 0.0, %v526
    %v528 = vpop.f32.mrb[0].mxu0
    %v529 = vpop.f32.mrb[0].mxu0
    %v530 = vpop.f32.mrb[0].mxu0
    %531 = vdwg.mxu0
    %532 = vrot.lane.b32.xlu0 %v135, 56
    %v533 = vpop.permute.xlu0 %532
    %v535 = vsel %vm139, %v483, 0
    %v538 = vsel %vm266, %v533, 0
    %540 = vmatprep.subr.bf16.mxu0 0
    %541 = vmatpush1.bf16.msra.mxu0 %v538
    %542 = vmatprep.subr.bf16.mxu0 0
    %543 = vmatpush1.bf16.msra.mxu0 0
    %544 = vmatprep.subr.bf16.mxu0 0
    %545 = vmatpush1.bf16.msra.mxu0 0
    %546 = vmatprep.subr.bf16.mxu0 0
    %547 = vmatpush1.bf16.msra.mxu0 0
    %548 = vmatprep.subr.bf16.mxu0 0
    %549 = vmatpush1.bf16.msra.mxu0 0
    %550 = vmatprep.subr.bf16.mxu0 0
    %551 = vmatpush1.bf16.msra.mxu0 0
    %552 = vmatprep.subr.bf16.mxu0 0
    %553 = vmatpush1.bf16.msra.mxu0 0
    %554 = vmatprep.subr.bf16.mxu0 0
    %555 = vmatpush1.bf16.msra.mxu0 0
    %556 = vmatprep.subr.bf16.mxu0 0
    %557 = vmatpush1.bf16.msra.mxu0 0
    %558 = vmatprep.subr.bf16.mxu0 0
    %559 = vmatpush1.bf16.msra.mxu0 0
    %560 = vmatprep.subr.bf16.mxu0 0
    %561 = vmatpush1.bf16.msra.mxu0 0
    %562 = vmatprep.subr.bf16.mxu0 0
    %563 = vmatpush1.bf16.msra.mxu0 0
    %564 = vmatprep.subr.bf16.mxu0 0
    %565 = vmatpush1.bf16.msra.mxu0 0
    %566 = vmatprep.subr.bf16.mxu0 0
    %567 = vmatpush1.bf16.msra.mxu0 0
    %568 = vmatprep.subr.bf16.mxu0 0
    %569 = vmatpush1.bf16.msra.mxu0 0
    %570 = vmatprep.subr.bf16.mxu0 0
    %571 = vmatpush1.bf16.msra.mxu0 0
    %572 = vmatprep.mubr.bf16.mxu0 0
    %573 = vmatmul.mubr.bf16.gmra.mrb[0].mxu0 %v535
    %v574 = vpop.f32.mrb[0].mxu0
    %v575 = vadd.f32 0.0, %v574
    %v576 = vpop.f32.mrb[0].mxu0
    %v577 = vpop.f32.mrb[0].mxu0
    %v578 = vpop.f32.mrb[0].mxu0
    %579 = vdwg.mxu0
    %580 = vrot.lane.b32.xlu0 %v134, 112
    %v581 = vpop.permute.xlu0 %580
    %582 = vrot.lane.b32.xlu0 %v134, 80
    %v583 = vpop.permute.xlu0 %582
    %v585 = vsel %vm139, %v581, 0
    %v588 = vsel %vm139, %v583, 0
    %590 = vmatprep.subr.bf16.mxu0 0
    %591 = vmatpush1.bf16.xpose.msra.mxu0 %v588
    %592 = vmatprep.subr.bf16.mxu0 0
    %593 = vmatpush1.bf16.xpose.msra.mxu0 0
    %594 = vmatprep.subr.bf16.mxu0 0
    %595 = vmatpush1.bf16.xpose.msra.mxu0 0
    %596 = vmatprep.subr.bf16.mxu0 0
    %597 = vmatpush1.bf16.xpose.msra.mxu0 0
    %598 = vmatprep.subr.bf16.mxu0 0
    %599 = vmatpush1.bf16.xpose.msra.mxu0 0
    %600 = vmatprep.subr.bf16.mxu0 0
    %601 = vmatpush1.bf16.xpose.msra.mxu0 0
    %602 = vmatprep.subr.bf16.mxu0 0
    %603 = vmatpush1.bf16.xpose.msra.mxu0 0
    %604 = vmatprep.subr.bf16.mxu0 0
    %605 = vmatpush1.bf16.xpose.msra.mxu0 0
    %606 = vmatprep.subr.bf16.mxu0 0
    %607 = vmatpush1.bf16.xpose.msra.mxu0 0
    %608 = vmatprep.subr.bf16.mxu0 0
    %609 = vmatpush1.bf16.xpose.msra.mxu0 0
    %610 = vmatprep.subr.bf16.mxu0 0
    %611 = vmatpush1.bf16.xpose.msra.mxu0 0
    %612 = vmatprep.subr.bf16.mxu0 0
    %613 = vmatpush1.bf16.xpose.msra.mxu0 0
    %614 = vmatprep.subr.bf16.mxu0 0
    %615 = vmatpush1.bf16.xpose.msra.mxu0 0
    %616 = vmatprep.subr.bf16.mxu0 0
    %617 = vmatpush1.bf16.xpose.msra.mxu0 0
    %618 = vmatprep.subr.bf16.mxu0 0
    %619 = vmatpush1.bf16.xpose.msra.mxu0 0
    %620 = vmatprep.subr.bf16.mxu0 0
    %621 = vmatpush1.bf16.xpose.msra.mxu0 0
    %622 = vmatprep.mubr.bf16.mxu0 0
    %623 = vmatmul.mubr.bf16.gmra.mrb[0].mxu0 %v585
    %v624 = vpop.f32.mrb[0].mxu0
    %v625 = vadd.f32 0.0, %v624
    %v626 = vpop.f32.mrb[0].mxu0
    %v627 = vpop.f32.mrb[0].mxu0
    %v628 = vpop.f32.mrb[0].mxu0
    %629 = vdwg.mxu0
    %630 = vrot.lane.b32.xlu0 %v135, 112
    %v631 = vpop.permute.xlu0 %630
    %632 = vrot.lane.b32.xlu0 %v135, 80
    %v633 = vpop.permute.xlu0 %632
    %v635 = vsel %vm139, %v631, 0
    %v638 = vsel %vm139, %v633, 0
    %640 = vmatprep.subr.bf16.mxu0 0
    %641 = vmatpush1.bf16.xpose.msra.mxu0 %v638
    %642 = vmatprep.subr.bf16.mxu0 0
    %643 = vmatpush1.bf16.xpose.msra.mxu0 0
    %644 = vmatprep.subr.bf16.mxu0 0
    %645 = vmatpush1.bf16.xpose.msra.mxu0 0
    %646 = vmatprep.subr.bf16.mxu0 0
    %647 = vmatpush1.bf16.xpose.msra.mxu0 0
    %648 = vmatprep.subr.bf16.mxu0 0
    %649 = vmatpush1.bf16.xpose.msra.mxu0 0
    %650 = vmatprep.subr.bf16.mxu0 0
    %651 = vmatpush1.bf16.xpose.msra.mxu0 0
    %652 = vmatprep.subr.bf16.mxu0 0
    %653 = vmatpush1.bf16.xpose.msra.mxu0 0
    %654 = vmatprep.subr.bf16.mxu0 0
    %655 = vmatpush1.bf16.xpose.msra.mxu0 0
    %656 = vmatprep.subr.bf16.mxu0 0
    %657 = vmatpush1.bf16.xpose.msra.mxu0 0
    %658 = vmatprep.subr.bf16.mxu0 0
    %659 = vmatpush1.bf16.xpose.msra.mxu0 0
    %660 = vmatprep.subr.bf16.mxu0 0
    %661 = vmatpush1.bf16.xpose.msra.mxu0 0
    %662 = vmatprep.subr.bf16.mxu0 0
    %663 = vmatpush1.bf16.xpose.msra.mxu0 0
    %664 = vmatprep.subr.bf16.mxu0 0
    %665 = vmatpush1.bf16.xpose.msra.mxu0 0
    %666 = vmatprep.subr.bf16.mxu0 0
    %667 = vmatpush1.bf16.xpose.msra.mxu0 0
    %668 = vmatprep.subr.bf16.mxu0 0
    %669 = vmatpush1.bf16.xpose.msra.mxu0 0
    %670 = vmatprep.subr.bf16.mxu0 0
    %671 = vmatpush1.bf16.xpose.msra.mxu0 0
    %672 = vmatprep.mubr.bf16.mxu0 0
    %673 = vmatmul.mubr.bf16.gmra.mrb[0].mxu0 %v635
    %v674 = vpop.f32.mrb[0].mxu0
    %v675 = vadd.f32 0.0, %v674
    %v676 = vpop.f32.mrb[0].mxu0
    %v677 = vpop.f32.mrb[0].mxu0
    %v678 = vpop.f32.mrb[0].mxu0
    %679 = vdwg.mxu0
    %v680 = vsel %vm139, %v625, -inf
    %681 = vmax.xlane.f32.xlu0 %v680
    %v682 = vpop.xlane.xlu0 %681
    %v683 = vsel %vm139, %v675, -inf
    %684 = vmax.xlane.f32.xlu0 %v683
    %v685 = vpop.xlane.xlu0 %684
    %v686 = vsub.f32 %v625, %v682
    %v687 = vsub.f32 %v675, %v685
    %v688 = vmul.f32 %v686, 1.442695
    %v689 = vpow.pop %v688
    %v690 = vmul.f32 %v687, 1.442695
    %v691 = vpow.pop %v690
    %v692 = vsel %vm139, %v689, 0.0
    %693 = vadd.xlane.f32.xlu0 %v692
    %v694 = vpop.xlane.xlu0 %693
    %v695 = vsel %vm139, %v691, 0.0
    %696 = vadd.xlane.f32.xlu0 %v695
    %v697 = vpop.xlane.xlu0 %696
    %v698 = vmul.f32 %v694, 5.656854
    %v699 = vmul.f32 %v697, 5.656854
    %v700 = vrcp.pop %v698
    %v701 = vrcp.pop %v699
    %v702 = vmul.f32 %v689, %v700
    %v703 = vmul.f32 %v691, %v701
    %v704 = vpack.c.bf16 %v702, %v702
    %v705 = vpack.c.bf16 %v703, %v703
    %706 = vrot.lane.b32.xlu0 %v134, 48
    %v707 = vpop.permute.xlu0 %706
    %v709 = vsel %vm139, %v704, 0
    %v712 = vsel %vm266, %v707, 0
    %714 = vmatprep.subr.bf16.mxu0 0
    %715 = vmatpush1.bf16.msra.mxu0 %v712
    %716 = vmatprep.subr.bf16.mxu0 0
    %717 = vmatpush1.bf16.msra.mxu0 0
    %718 = vmatprep.subr.bf16.mxu0 0
    %719 = vmatpush1.bf16.msra.mxu0 0
    %720 = vmatprep.subr.bf16.mxu0 0
    %721 = vmatpush1.bf16.msra.mxu0 0
    %722 = vmatprep.subr.bf16.mxu0 0
    %723 = vmatpush1.bf16.msra.mxu0 0
    %724 = vmatprep.subr.bf16.mxu0 0
    %725 = vmatpush1.bf16.msra.mxu0 0
    %726 = vmatprep.subr.bf16.mxu0 0
    %727 = vmatpush1.bf16.msra.mxu0 0
    %728 = vmatprep.subr.bf16.mxu0 0
    %729 = vmatpush1.bf16.msra.mxu0 0
    %730 = vmatprep.subr.bf16.mxu0 0
    %731 = vmatpush1.bf16.msra.mxu0 0
    %732 = vmatprep.subr.bf16.mxu0 0
    %733 = vmatpush1.bf16.msra.mxu0 0
    %734 = vmatprep.subr.bf16.mxu0 0
    %735 = vmatpush1.bf16.msra.mxu0 0
    %736 = vmatprep.subr.bf16.mxu0 0
    %737 = vmatpush1.bf16.msra.mxu0 0
    %738 = vmatprep.subr.bf16.mxu0 0
    %739 = vmatpush1.bf16.msra.mxu0 0
    %740 = vmatprep.subr.bf16.mxu0 0
    %741 = vmatpush1.bf16.msra.mxu0 0
    %742 = vmatprep.subr.bf16.mxu0 0
    %743 = vmatpush1.bf16.msra.mxu0 0
    %744 = vmatprep.subr.bf16.mxu0 0
    %745 = vmatpush1.bf16.msra.mxu0 0
    %746 = vmatprep.mubr.bf16.mxu0 0
    %747 = vmatmul.mubr.bf16.gmra.mrb[0].mxu0 %v709
    %v748 = vpop.f32.mrb[0].mxu0
    %v749 = vadd.f32 0.0, %v748
    %v750 = vpop.f32.mrb[0].mxu0
    %v751 = vpop.f32.mrb[0].mxu0
    %v752 = vpop.f32.mrb[0].mxu0
    %753 = vdwg.mxu0
    %754 = vrot.lane.b32.xlu0 %v135, 48
    %v755 = vpop.permute.xlu0 %754
    %v757 = vsel %vm139, %v705, 0
    %v760 = vsel %vm266, %v755, 0
    %762 = vmatprep.subr.bf16.mxu0 0
    %763 = vmatpush1.bf16.msra.mxu0 %v760
    %764 = vmatprep.subr.bf16.mxu0 0
    %765 = vmatpush1.bf16.msra.mxu0 0
    %766 = vmatprep.subr.bf16.mxu0 0
    %767 = vmatpush1.bf16.msra.mxu0 0
    %768 = vmatprep.subr.bf16.mxu0 0
    %769 = vmatpush1.bf16.msra.mxu0 0
    %770 = vmatprep.subr.bf16.mxu0 0
    %771 = vmatpush1.bf16.msra.mxu0 0
    %772 = vmatprep.subr.bf16.mxu0 0
    %773 = vmatpush1.bf16.msra.mxu0 0
    %774 = vmatprep.subr.bf16.mxu0 0
    %775 = vmatpush1.bf16.msra.mxu0 0
    %776 = vmatprep.subr.bf16.mxu0 0
    %777 = vmatpush1.bf16.msra.mxu0 0
    %778 = vmatprep.subr.bf16.mxu0 0
    %779 = vmatpush1.bf16.msra.mxu0 0
    %780 = vmatprep.subr.bf16.mxu0 0
    %781 = vmatpush1.bf16.msra.mxu0 0
    %782 = vmatprep.subr.bf16.mxu0 0
    %783 = vmatpush1.bf16.msra.mxu0 0
    %784 = vmatprep.subr.bf16.mxu0 0
    %785 = vmatpush1.bf16.msra.mxu0 0
    %786 = vmatprep.subr.bf16.mxu0 0
    %787 = vmatpush1.bf16.msra.mxu0 0
    %788 = vmatprep.subr.bf16.mxu0 0
    %789 = vmatpush1.bf16.msra.mxu0 0
    %790 = vmatprep.subr.bf16.mxu0 0
    %791 = vmatpush1.bf16.msra.mxu0 0
    %792 = vmatprep.subr.bf16.mxu0 0
    %793 = vmatpush1.bf16.msra.mxu0 0
    %794 = vmatprep.mubr.bf16.mxu0 0
    %795 = vmatmul.mubr.bf16.gmra.mrb[0].mxu0 %v757
    %v796 = vpop.f32.mrb[0].mxu0
    %v797 = vadd.f32 0.0, %v796
    %v798 = vpop.f32.mrb[0].mxu0
    %v799 = vpop.f32.mrb[0].mxu0
    %v800 = vpop.f32.mrb[0].mxu0
    %801 = vdwg.mxu0
    %802 = vrot.lane.b32.xlu0 %v134, 104
    %v803 = vpop.permute.xlu0 %802
    %804 = vrot.lane.b32.xlu0 %v134, 72
    %v805 = vpop.permute.xlu0 %804
    %v807 = vsel %vm139, %v803, 0
    %v810 = vsel %vm139, %v805, 0
    %812 = vmatprep.subr.bf16.mxu0 0
    %813 = vmatpush1.bf16.xpose.msra.mxu0 %v810
    %814 = vmatprep.subr.bf16.mxu0 0
    %815 = vmatpush1.bf16.xpose.msra.mxu0 0
    %816 = vmatprep.subr.bf16.mxu0 0
    %817 = vmatpush1.bf16.xpose.msra.mxu0 0
    %818 = vmatprep.subr.bf16.mxu0 0
    %819 = vmatpush1.bf16.xpose.msra.mxu0 0
    %820 = vmatprep.subr.bf16.mxu0 0
    %821 = vmatpush1.bf16.xpose.msra.mxu0 0
    %822 = vmatprep.subr.bf16.mxu0 0
    %823 = vmatpush1.bf16.xpose.msra.mxu0 0
    %824 = vmatprep.subr.bf16.mxu0 0
    %825 = vmatpush1.bf16.xpose.msra.mxu0 0
    %826 = vmatprep.subr.bf16.mxu0 0
    %827 = vmatpush1.bf16.xpose.msra.mxu0 0
    %828 = vmatprep.subr.bf16.mxu0 0
    %829 = vmatpush1.bf16.xpose.msra.mxu0 0
    %830 = vmatprep.subr.bf16.mxu0 0
    %831 = vmatpush1.bf16.xpose.msra.mxu0 0
    %832 = vmatprep.subr.bf16.mxu0 0
    %833 = vmatpush1.bf16.xpose.msra.mxu0 0
    %834 = vmatprep.subr.bf16.mxu0 0
    %835 = vmatpush1.bf16.xpose.msra.mxu0 0
    %836 = vmatprep.subr.bf16.mxu0 0
    %837 = vmatpush1.bf16.xpose.msra.mxu0 0
    %838 = vmatprep.subr.bf16.mxu0 0
    %839 = vmatpush1.bf16.xpose.msra.mxu0 0
    %840 = vmatprep.subr.bf16.mxu0 0
    %841 = vmatpush1.bf16.xpose.msra.mxu0 0
    %842 = vmatprep.subr.bf16.mxu0 0
    %843 = vmatpush1.bf16.xpose.msra.mxu0 0
    %844 = vmatprep.mubr.bf16.mxu0 0
    %845 = vmatmul.mubr.bf16.gmra.mrb[0].mxu0 %v807
    %v846 = vpop.f32.mrb[0].mxu0
    %v847 = vadd.f32 0.0, %v846
    %v848 = vpop.f32.mrb[0].mxu0
    %v849 = vpop.f32.mrb[0].mxu0
    %v850 = vpop.f32.mrb[0].mxu0
    %851 = vdwg.mxu0
    %852 = vrot.lane.b32.xlu0 %v135, 104
    %v853 = vpop.permute.xlu0 %852
    %854 = vrot.lane.b32.xlu0 %v135, 72
    %v855 = vpop.permute.xlu0 %854
    %v857 = vsel %vm139, %v853, 0
    %v860 = vsel %vm139, %v855, 0
    %862 = vmatprep.subr.bf16.mxu0 0
    %863 = vmatpush1.bf16.xpose.msra.mxu0 %v860
    %864 = vmatprep.subr.bf16.mxu0 0
    %865 = vmatpush1.bf16.xpose.msra.mxu0 0
    %866 = vmatprep.subr.bf16.mxu0 0
    %867 = vmatpush1.bf16.xpose.msra.mxu0 0
    %868 = vmatprep.subr.bf16.mxu0 0
    %869 = vmatpush1.bf16.xpose.msra.mxu0 0
    %870 = vmatprep.subr.bf16.mxu0 0
    %871 = vmatpush1.bf16.xpose.msra.mxu0 0
    %872 = vmatprep.subr.bf16.mxu0 0
    %873 = vmatpush1.bf16.xpose.msra.mxu0 0
    %874 = vmatprep.subr.bf16.mxu0 0
    %875 = vmatpush1.bf16.xpose.msra.mxu0 0
    %876 = vmatprep.subr.bf16.mxu0 0
    %877 = vmatpush1.bf16.xpose.msra.mxu0 0
    %878 = vmatprep.subr.bf16.mxu0 0
    %879 = vmatpush1.bf16.xpose.msra.mxu0 0
    %880 = vmatprep.subr.bf16.mxu0 0
    %881 = vmatpush1.bf16.xpose.msra.mxu0 0
    %882 = vmatprep.subr.bf16.mxu0 0
    %883 = vmatpush1.bf16.xpose.msra.mxu0 0
    %884 = vmatprep.subr.bf16.mxu0 0
    %885 = vmatpush1.bf16.xpose.msra.mxu0 0
    %886 = vmatprep.subr.bf16.mxu0 0
    %887 = vmatpush1.bf16.xpose.msra.mxu0 0
    %888 = vmatprep.subr.bf16.mxu0 0
    %889 = vmatpush1.bf16.xpose.msra.mxu0 0
    %890 = vmatprep.subr.bf16.mxu0 0
    %891 = vmatpush1.bf16.xpose.msra.mxu0 0
    %892 = vmatprep.subr.bf16.mxu0 0
    %893 = vmatpush1.bf16.xpose.msra.mxu0 0
    %894 = vmatprep.mubr.bf16.mxu0 0
    %895 = vmatmul.mubr.bf16.gmra.mrb[0].mxu0 %v857
    %v896 = vpop.f32.mrb[0].mxu0
    %v897 = vadd.f32 0.0, %v896
    %v898 = vpop.f32.mrb[0].mxu0
    %v899 = vpop.f32.mrb[0].mxu0
    %v900 = vpop.f32.mrb[0].mxu0
    %901 = vdwg.mxu0
    %v902 = vsel %vm139, %v847, -inf
    %903 = vmax.xlane.f32.xlu0 %v902
    %v904 = vpop.xlane.xlu0 %903
    %v905 = vsel %vm139, %v897, -inf
    %906 = vmax.xlane.f32.xlu0 %v905
    %v907 = vpop.xlane.xlu0 %906
    %v908 = vsub.f32 %v847, %v904
    %v909 = vsub.f32 %v897, %v907
    %v910 = vmul.f32 %v908, 1.442695
    %v911 = vpow.pop %v910
    %v912 = vmul.f32 %v909, 1.442695
    %v913 = vpow.pop %v912
    %v914 = vsel %vm139, %v911, 0.0
    %915 = vadd.xlane.f32.xlu0 %v914
    %v916 = vpop.xlane.xlu0 %915
    %v917 = vsel %vm139, %v913, 0.0
    %918 = vadd.xlane.f32.xlu0 %v917
    %v919 = vpop.xlane.xlu0 %918
    %v920 = vmul.f32 %v916, 5.656854
    %v921 = vmul.f32 %v919, 5.656854
    %v922 = vrcp.pop %v920
    %v923 = vrcp.pop %v921
    %v924 = vmul.f32 %v911, %v922
    %v925 = vmul.f32 %v913, %v923
    %v926 = vpack.c.bf16 %v924, %v924
    %v927 = vpack.c.bf16 %v925, %v925
    %928 = vrot.lane.b32.xlu0 %v134, 40
    %v929 = vpop.permute.xlu0 %928
    %v931 = vsel %vm139, %v926, 0
    %v934 = vsel %vm266, %v929, 0
    %936 = vmatprep.subr.bf16.mxu0 0
    %937 = vmatpush1.bf16.msra.mxu0 %v934
    %938 = vmatprep.subr.bf16.mxu0 0
    %939 = vmatpush1.bf16.msra.mxu0 0
    %940 = vmatprep.subr.bf16.mxu0 0
    %941 = vmatpush1.bf16.msra.mxu0 0
    %942 = vmatprep.subr.bf16.mxu0 0
    %943 = vmatpush1.bf16.msra.mxu0 0
    %944 = vmatprep.subr.bf16.mxu0 0
    %945 = vmatpush1.bf16.msra.mxu0 0
    %946 = vmatprep.subr.bf16.mxu0 0
    %947 = vmatpush1.bf16.msra.mxu0 0
    %948 = vmatprep.subr.bf16.mxu0 0
    %949 = vmatpush1.bf16.msra.mxu0 0
    %950 = vmatprep.subr.bf16.mxu0 0
    %951 = vmatpush1.bf16.msra.mxu0 0
    %952 = vmatprep.subr.bf16.mxu0 0
    %953 = vmatpush1.bf16.msra.mxu0 0
    %954 = vmatprep.subr.bf16.mxu0 0
    %955 = vmatpush1.bf16.msra.mxu0 0
    %956 = vmatprep.subr.bf16.mxu0 0
    %957 = vmatpush1.bf16.msra.mxu0 0
    %958 = vmatprep.subr.bf16.mxu0 0
    %959 = vmatpush1.bf16.msra.mxu0 0
    %960 = vmatprep.subr.bf16.mxu0 0
    %961 = vmatpush1.bf16.msra.mxu0 0
    %962 = vmatprep.subr.bf16.mxu0 0
    %963 = vmatpush1.bf16.msra.mxu0 0
    %964 = vmatprep.subr.bf16.mxu0 0
    %965 = vmatpush1.bf16.msra.mxu0 0
    %966 = vmatprep.subr.bf16.mxu0 0
    %967 = vmatpush1.bf16.msra.mxu0 0
    %968 = vmatprep.mubr.bf16.mxu0 0
    %969 = vmatmul.mubr.bf16.gmra.mrb[0].mxu0 %v931
    %v970 = vpop.f32.mrb[0].mxu0
    %v971 = vadd.f32 0.0, %v970
    %v972 = vpop.f32.mrb[0].mxu0
    %v973 = vpop.f32.mrb[0].mxu0
    %v974 = vpop.f32.mrb[0].mxu0
    %975 = vdwg.mxu0
    %976 = vrot.lane.b32.xlu0 %v135, 40
    %v977 = vpop.permute.xlu0 %976
    %v979 = vsel %vm139, %v927, 0
    %v982 = vsel %vm266, %v977, 0
    %984 = vmatprep.subr.bf16.mxu0 0
    %985 = vmatpush1.bf16.msra.mxu0 %v982
    %986 = vmatprep.subr.bf16.mxu0 0
    %987 = vmatpush1.bf16.msra.mxu0 0
    %988 = vmatprep.subr.bf16.mxu0 0
    %989 = vmatpush1.bf16.msra.mxu0 0
    %990 = vmatprep.subr.bf16.mxu0 0
    %991 = vmatpush1.bf16.msra.mxu0 0
    %992 = vmatprep.subr.bf16.mxu0 0
    %993 = vmatpush1.bf16.msra.mxu0 0
    %994 = vmatprep.subr.bf16.mxu0 0
    %995 = vmatpush1.bf16.msra.mxu0 0
    %996 = vmatprep.subr.bf16.mxu0 0
    %997 = vmatpush1.bf16.msra.mxu0 0
    %998 = vmatprep.subr.bf16.mxu0 0
    %999 = vmatpush1.bf16.msra.mxu0 0
    %1000 = vmatprep.subr.bf16.mxu0 0
    %1001 = vmatpush1.bf16.msra.mxu0 0
    %1002 = vmatprep.subr.bf16.mxu0 0
    %1003 = vmatpush1.bf16.msra.mxu0 0
    %1004 = vmatprep.subr.bf16.mxu0 0
    %1005 = vmatpush1.bf16.msra.mxu0 0
    %1006 = vmatprep.subr.bf16.mxu0 0
    %1007 = vmatpush1.bf16.msra.mxu0 0
    %1008 = vmatprep.subr.bf16.mxu0 0
    %1009 = vmatpush1.bf16.msra.mxu0 0
    %1010 = vmatprep.subr.bf16.mxu0 0
    %1011 = vmatpush1.bf16.msra.mxu0 0
    %1012 = vmatprep.subr.bf16.mxu0 0
    %1013 = vmatpush1.bf16.msra.mxu0 0
    %1014 = vmatprep.subr.bf16.mxu0 0
    %1015 = vmatpush1.bf16.msra.mxu0 0
    %1016 = vmatprep.mubr.bf16.mxu0 0
    %1017 = vmatmul.mubr.bf16.gmra.mrb[0].mxu0 %v979
    %v1018 = vpop.f32.mrb[0].mxu0
    %v1019 = vadd.f32 0.0, %v1018
    %v1020 = vpop.f32.mrb[0].mxu0
    %v1021 = vpop.f32.mrb[0].mxu0
    %v1022 = vpop.f32.mrb[0].mxu0
    %1023 = vdwg.mxu0
    %1026 = vrot.lane.b32.xlu0 %v527, 8
    %v1027 = vpop.permute.xlu0 %1026
    %1028 = vrot.lane.b32.xlu0 %v575, 8
    %v1029 = vpop.permute.xlu0 %1028
    %1034 = vrot.lane.b32.xlu0 %v749, 16
    %v1035 = vpop.permute.xlu0 %1034
    %1036 = vrot.lane.b32.xlu0 %v797, 16
    %v1037 = vpop.permute.xlu0 %1036
    %1042 = vrot.lane.b32.xlu0 %v971, 24
    %v1043 = vpop.permute.xlu0 %1042
    %1044 = vrot.lane.b32.xlu0 %v1019, 24
    %v1045 = vpop.permute.xlu0 %1044
    %v1048 = vsel %vm139, %v305, %v1027
    %v1049 = vsel %vm139, %v353, %v1029
    %vm1050 = vcmask 130048
    %v1051 = vsel %vm1050, %v1048, %v1035
    %v1052 = vsel %vm1050, %v1049, %v1037
    %vm1053 = vcmask 195584
    %v1054 = vsel %vm1053, %v1051, %v1043
    %v1055 = vsel %vm1053, %v1052, %v1045
    %v1056 = vpack.c.bf16 %v1055, %v1054
    %v1057 = vld [vmem:[#allocation7] sm:$0xf]
    %v1058 = vld [vmem:[#allocation7 + $0x4] sm:$0xf]
    %v1059 = vld [vmem:[#allocation7 + $0x8] sm:$0xf]
    %v1060 = vld [vmem:[#allocation7 + $0xc] sm:$0xf]
    %v1061 = vld [vmem:[%s4] sm:$0x1]
    %v1063 = vlaneseq
    %v1064 = vshrl.u32 %v1063, 7
    %v1065 = vsub.s32 0, %v1064
    %v1066 = vrot.slane %v1061, %v1065
    %v1072 = vunpack.c.l.b16 %v1057
    %v1073 = vunpack.c.l.b16 %v1058
    %v1074 = vunpack.c.l.b16 %v1059
    %v1075 = vunpack.c.l.b16 %v1060
    %v1076 = vpack.c.b16 %v1073, %v1072
    %v1077 = vpack.c.b16 %v1075, %v1074
    %v1081 = vsel %vm89, %v1056, 0
    %1083 = vmatprep.subr.bf16.mxu0 0
    %1084 = vmatpush1.bf16.msra.mxu0 %v1076
    %1085 = vmatprep.subr.bf16.mxu0 0
    %1086 = vmatpush1.bf16.msra.mxu0 %v1077
    %1087 = vmatprep.subr.bf16.mxu0 0
    %1088 = vmatpush1.bf16.msra.mxu0 0
    %1089 = vmatprep.subr.bf16.mxu0 0
    %1090 = vmatpush1.bf16.msra.mxu0 0
    %1091 = vmatprep.subr.bf16.mxu0 0
    %1092 = vmatpush1.bf16.msra.mxu0 0
    %1093 = vmatprep.subr.bf16.mxu0 0
    %1094 = vmatpush1.bf16.msra.mxu0 0
    %1095 = vmatprep.subr.bf16.mxu0 0
    %1096 = vmatpush1.bf16.msra.mxu0 0
    %1097 = vmatprep.subr.bf16.mxu0 0
    %1098 = vmatpush1.bf16.msra.mxu0 0
    %1099 = vmatprep.subr.bf16.mxu0 0
    %1100 = vmatpush1.bf16.msra.mxu0 0
    %1101 = vmatprep.subr.bf16.mxu0 0
    %1102 = vmatpush1.bf16.msra.mxu0 0
    %1103 = vmatprep.subr.bf16.mxu0 0
    %1104 = vmatpush1.bf16.msra.mxu0 0
    %1105 = vmatprep.subr.bf16.mxu0 0
    %1106 = vmatpush1.bf16.msra.mxu0 0
    %1107 = vmatprep.subr.bf16.mxu0 0
    %1108 = vmatpush1.bf16.msra.mxu0 0
    %1109 = vmatprep.subr.bf16.mxu0 0
    %1110 = vmatpush1.bf16.msra.mxu0 0
    %1111 = vmatprep.subr.bf16.mxu0 0
    %1112 = vmatpush1.bf16.msra.mxu0 0
    %1113 = vmatprep.subr.bf16.mxu0 0
    %1114 = vmatpush1.bf16.msra.mxu0 0
    %1115 = vmatprep.mubr.bf16.mxu0 0
    %1116 = vmatmul.mubr.bf16.gmra.mrb[0].mxu0 %v1081
    %v1117 = vpop.f32.mrb[0].mxu0
    %v1118 = vadd.f32 %v1066, %v1117
    %v1119 = vpop.f32.mrb[0].mxu0
    %v1120 = vpop.f32.mrb[0].mxu0
    %v1121 = vadd.f32 %v1066, %v1120
    %v1122 = vpop.f32.mrb[0].mxu0
    %1123 = vdwg.mxu0
    %v1124 = vadd.f32 %v1118, %v63
    %v1125 = vadd.f32 %v1121, %v64
    %1126 = vst.msk [vmem:[#allocation8] sm:$0xff] %vm89, %v1124
    %1127 = vst.msk [vmem:[#allocation8 + $0x8] sm:$0xff] %vm89, %v1125
    // Predicated region
    $region34: #{tpu_custom_call.1} parent=1 // pred_check
      _
    $region35: #{tpu_custom_call.1} parent=1 // pred_check_branch
      %1129 = sbr.rel (0) target = $region37
    $region36: #{tpu_custom_call.1} parent=1 // pred_region
      %s1131 = ssub.s32 256, 256
      %1132 = vsyncadd [#allocation4], %s1131
      %s1133 = sshll.u32 [#allocation8], 4
      %s1134 = int_to_ptr.vmem [resolvable:$true] %s1133
      %1139 = dma.vmem_to_hbm [thread:$0]  %s1134, 256, %s5, [#allocation4], 128, 128, 8
    $region37: #{tpu_custom_call.1} parent=1 // pred_fallthru
      _
    // Predicated region
    $region38: #{tpu_custom_call.1} parent=1 // pred_check
      _
    $region39: #{tpu_custom_call.1} parent=1 // pred_check_branch
      %1141 = sbr.rel (0) target = $region41
    $region40: #{tpu_custom_call.1} parent=1 // pred_region
      %1142 = dma.done [#allocation4], 256
    $region41: #{tpu_custom_call.1} parent=1 // pred_fallthru
      _
    %1143 = vsyncpa [#allocation3], 1
    %1144 = vsyncpa [#allocation6], 1
    %1145 = vsyncpa [#allocation4], 1

</llo_original>
